<compile_context>
chip_gen: v7x
topology: tpu7x:2x2x1
jax: 0.10.0
libtpu: 0.0.40
codegen_flags: <defaults>
</compile_context>

<pallas_src>
import functools

import jax
import jax.numpy as jnp
from jax.experimental import pallas as pl
from jax.experimental.pallas import tpu as pltpu


def _conv_bn_relu_kernel(x_ref, wt_ref, shift_ref, o_ref, *, H_out, KH, apply_relu):
    # x_ref:     (B_tile, H + 2*pad, W*C_in)      H-padded input slab (bf16)
    # wt_ref:    (KH*W*C_in, W_out*C_out)         Toeplitz weight, BN scale folded (bf16)
    # shift_ref: (1, W_out*C_out)                 folded BN shift (f32)
    # o_ref:     (B_tile, H_out, W_out*C_out)     lane-dense output slab
    B_tile, _, WC_in = x_ref.shape
    WC_out = o_ref.shape[-1]

    x = x_ref[...]

    # im2row along H only (W padding is already folded into the Toeplitz weight):
    #   lhs[b, h, kh*WC_in + k] = x[b, h + kh, k]
    parts = [x[:, kh:kh + H_out, :] for kh in range(KH)]
    lhs = parts[0] if KH == 1 else jnp.concatenate(parts, axis=-1)
    lhs = lhs.reshape(B_tile * H_out, KH * WC_in)

    # Single MXU contraction over KH*W*C_in, f32 accumulation.
    acc = jnp.dot(lhs, wt_ref[...], preferred_element_type=jnp.float32)

    y = acc + shift_ref[...]                 # fused BatchNorm shift (f32)
    if apply_relu:
        y = jnp.maximum(y, 0.0)              # fused ReLU
    o_ref[...] = y.reshape(B_tile, H_out, WC_out).astype(o_ref.dtype)


def _build_toeplitz_weight(w_hwio, W, W_out, padding, dtype):
    """wt[kh*W*C_in + w*C_in + ci, w_out*C_out + co] = w[kh, w + padding - w_out, ci, co]
    (zero where the tap falls in the W padding)."""
    KH, KW, C_in, C_out = w_hwio.shape
    w_in = jnp.arange(W)[:, None]                 # (W, 1)
    w_o = jnp.arange(W_out)[None, :]              # (1, W_out)
    kw = w_in + padding - w_o                     # (W, W_out)
    valid = (kw >= 0) & (kw < KW)
    kw_c = jnp.clip(kw, 0, KW - 1)
    gath = w_hwio[:, kw_c, :, :]                  # (KH, W, W_out, C_in, C_out)
    gath = gath * valid[None, :, :, None, None].astype(w_hwio.dtype)
    wt = jnp.transpose(gath, (0, 1, 3, 2, 4))     # (KH, W, C_in, W_out, C_out)
    return wt.reshape(KH * W * C_in, W_out * C_out).astype(dtype)


def basic_conv(x_nchw, weight_oihw, gamma, beta, running_mean, running_var,
               *, stride=1, padding=0, dilation=1, groups=1, eps=1e-5,
               relu=True, bn=True, compute_dtype=jnp.bfloat16, max_batch_tile=8):
    """Forward pass of BasicConv: Conv2d(bias=False) -> BatchNorm2d -> ReLU."""
    # TODO(synk): stride > 1, dilation > 1 and groups > 1 are not implemented
    # (the reference module is exercised with its defaults).
    assert stride == 1 and dilation == 1 and groups == 1

    N, C_in, H, W = x_nchw.shape
    C_out, C_in_w, KH, KW = weight_oihw.shape
    assert C_in_w == C_in
    H_out = H + 2 * padding - KH + 1
    W_out = W + 2 * padding - KW + 1
    WC_in, WC_out = W * C_in, W_out * C_out
    Hp = H + 2 * padding

    # Batch tile: amortize the fixed per-grid-step overhead over several images.
    B_tile = max(1, min(N, max_batch_tile))
    while N % B_tile:
        B_tile -= 1

    # --- wrapper-side (one-time) weight / BN preparation ------------------
    w_hwio = jnp.transpose(weight_oihw, (2, 3, 1, 0)).astype(jnp.float32)
    if bn:
        scale = gamma / jnp.sqrt(running_var + eps)
        shift = beta - running_mean * scale
    else:
        scale = jnp.ones((C_out,), jnp.float32)
        shift = jnp.zeros((C_out,), jnp.float32)
    w_scaled = w_hwio * scale[None, None, None, :]          # fold BN scale
    wt = _build_toeplitz_weight(w_scaled, W, W_out, padding, compute_dtype)
    shift_wc = jnp.tile(shift.astype(jnp.float32), W_out).reshape(1, WC_out)

    # Activations: NCHW -> (N, H, W*C_in), channels fastest on the lane axis.
    # H zero-padding is fused into this (single) XLA relayout copy, so the
    # kernel needs no padded scratch / slab copy.
    # TODO(synk): drop this transpose entirely in a channels-last graph.
    x_flat = jnp.transpose(x_nchw, (0, 2, 3, 1)).reshape(N, H, WC_in)
    if padding > 0:
        x_flat = jnp.pad(x_flat, ((0, 0), (padding, padding), (0, 0)))
    x_flat = x_flat.astype(compute_dtype)

    kernel = functools.partial(
        _conv_bn_relu_kernel, H_out=H_out, KH=KH, apply_relu=relu)

    # VMEM budget: double-buffered activation/output blocks, single-buffered
    # resident weight/shift, plus the in-register/spilled im2row LHS.
    itemsize = jnp.dtype(compute_dtype).itemsize
    out_itemsize = jnp.dtype(x_nchw.dtype).itemsize
    footprint = (2 * B_tile * Hp * WC_in * itemsize
                 + KH * WC_in * WC_out * itemsize + WC_out * 4
                 + 2 * B_tile * H_out * WC_out * out_itemsize
                 + B_tile * H_out * KH * WC_in * itemsize)
    vmem_limit = int(min(max(4 * footprint, 16 << 20), 32 << 20))

    def run(single_buffer_resident):
        resident_kw = (dict(pipeline_mode=pl.Buffered(1))
                       if single_buffer_resident else {})
        return pl.pallas_call(
            kernel,
            out_shape=jax.ShapeDtypeStruct((N, H_out, WC_out), x_nchw.dtype),
            grid_spec=pltpu.PrefetchScalarGridSpec(
                num_scalar_prefetch=0,
                grid=(N // B_tile,),
                in_specs=[
                    pl.BlockSpec((B_tile, Hp, WC_in), lambda n: (n, 0, 0)),
                    pl.BlockSpec((KH * WC_in, WC_out), lambda n: (0, 0),
                                 **resident_kw),
                    pl.BlockSpec((1, WC_out), lambda n: (0, 0),
                                 **resident_kw),
                ],
                out_specs=pl.BlockSpec((B_tile, H_out, WC_out),
                                       lambda n: (n, 0, 0)),
            ),
            compiler_params=pltpu.CompilerParams(
                dimension_semantics=("parallel",),
                vmem_limit_bytes=vmem_limit),
        )(x_flat, wt, shift_wc)

    try:
        out = run(single_buffer_resident=True)
    except Exception:
        # Fallback for jax versions without BlockSpec.pipeline_mode /
        # pl.Buffered(1): accept default double-buffering of the small weight.
        out = run(single_buffer_resident=False)

    # (N, H_out, W_out*C_out) -> NCHW (reshape is free; transpose kept only to
    # honor the PyTorch NCHW interface).
    out = out.reshape(N, H_out, W_out, C_out)
    return jnp.transpose(out, (0, 3, 1, 2))


if __name__ == "__main__":
    key = jax.random.PRNGKey(0)
    k1, k2, k3, k4, k5, k6 = jax.random.split(key, 6)

    # BasicConv(in_planes=4, out_planes=8, kernel_size=3, padding=1)
    N, C_in, H, W = 2, 4, 16, 16
    C_out, K, padding = 8, 3, 1
    eps = 1e-5

    x = jax.random.normal(k1, (N, C_in, H, W), jnp.float32)
    weight = 0.1 * jax.random.normal(k2, (C_out, C_in, K, K), jnp.float32)
    gamma = 1.0 + 0.1 * jax.random.normal(k3, (C_out,), jnp.float32)
    beta = 0.1 * jax.random.normal(k4, (C_out,), jnp.float32)
    running_mean = 0.1 * jax.random.normal(k5, (C_out,), jnp.float32)
    running_var = jnp.abs(jax.random.normal(k6, (C_out,), jnp.float32)) + 0.5

    out = basic_conv(x, weight, gamma, beta, running_mean, running_var,
                     padding=padding, eps=eps)
    out = jax.block_until_ready(out)

    # Pure-JAX f32 reference for correctness (BatchNorm inference semantics).
    ref = jax.lax.conv_general_dilated(
        x, weight, window_strides=(1, 1),
        padding=[(padding, padding), (padding, padding)],
        dimension_numbers=("NCHW", "OIHW", "NCHW"))
    scale = gamma / jnp.sqrt(running_var + eps)
    shift = beta - running_mean * scale
    ref = ref * scale[None, :, None, None] + shift[None, :, None, None]
    ref = jnp.maximum(ref, 0.0)

    assert out.shape == (N, C_out, H, W), out.shape
    err = float(jnp.max(jnp.abs(out - ref)))
    # bf16 MXU inputs with f32 accumulation: loosened tolerance vs the f32 path.
    assert jnp.allclose(out, ref, atol=5e-2, rtol=5e-2), err

    print("KERNEL_OK")
</pallas_src>

<mosaic_0001>
module attributes {stable_mosaic.version = 11 : i64} {
  func.func @_conv_bn_relu_kernel(%arg0: i32, %arg1: memref<2x18x64xbf16, #tpu.memory_space<vmem>>, %arg2: memref<192x128xbf16, #tpu.memory_space<vmem>>, %arg3: memref<1x128xf32, #tpu.memory_space<vmem>>, %arg4: memref<2x16x128xf32, #tpu.memory_space<vmem>>) attributes {dimension_semantics = [#tpu.dimension_semantics<parallel>], iteration_bounds = array<i64: 1>, scalar_prefetch = 0 : i64, scratch_operands = 0 : i64, tpu.core_type = #tpu.core_type<tc>, window_params = [{transform_indices = @transform_0, window_bounds = array<i64: 2, 18, 64>}, {pipeline_mode = #tpu.pipeline_mode<synchronous>, transform_indices = @transform_1, window_bounds = array<i64: 192, 128>}, {pipeline_mode = #tpu.pipeline_mode<synchronous>, transform_indices = @transform_2, window_bounds = array<i64: 1, 128>}, {transform_indices = @transform_3, window_bounds = array<i64: 2, 16, 128>}]} {
    %c0 = arith.constant 0 : index
    %c0_0 = arith.constant 0 : index
    %c0_1 = arith.constant 0 : index
    %0 = vector.load %arg1[%c0, %c0_0, %c0_1] : memref<2x18x64xbf16, #tpu.memory_space<vmem>>, vector<2x18x64xbf16>
    %1 = vector.extract_strided_slice %0 {offsets = [0, 0, 0], sizes = [2, 16, 64], strides = [1, 1, 1]} : vector<2x18x64xbf16> to vector<2x16x64xbf16>
    %2 = vector.extract_strided_slice %0 {offsets = [0, 1, 0], sizes = [2, 16, 64], strides = [1, 1, 1]} : vector<2x18x64xbf16> to vector<2x16x64xbf16>
    %3 = vector.extract_strided_slice %0 {offsets = [0, 2, 0], sizes = [2, 16, 64], strides = [1, 1, 1]} : vector<2x18x64xbf16> to vector<2x16x64xbf16>
    %4 = tpu.concatenate %1, %2, %3 in 2 : vector<2x16x64xbf16>, vector<2x16x64xbf16>, vector<2x16x64xbf16> -> vector<2x16x192xbf16>
    %5 = vector.shape_cast %4 : vector<2x16x192xbf16> to vector<32x192xbf16>
    %c0_2 = arith.constant 0 : index
    %c0_3 = arith.constant 0 : index
    %6 = vector.load %arg2[%c0_2, %c0_3] : memref<192x128xbf16, #tpu.memory_space<vmem>>, vector<192x128xbf16>
    %cst = arith.constant dense<0.000000e+00> : vector<32x128xf32>
    %7 = tpu.matmul %5, %6, %cst {dimension_numbers = #tpu.dot_dimension_numbers<[1], [0], [0], [1], [0, 0, 1, 1], [], []>} : vector<32x192xbf16>, vector<192x128xbf16>, vector<32x128xf32> -> vector<32x128xf32>
    %c0_4 = arith.constant 0 : index
    %c0_5 = arith.constant 0 : index
    %8 = vector.load %arg3[%c0_4, %c0_5] : memref<1x128xf32, #tpu.memory_space<vmem>>, vector<1x128xf32>
    %9 = vector.broadcast %8 : vector<1x128xf32> to vector<32x128xf32>
    %10 = arith.addf %7, %9 : vector<32x128xf32>
    %cst_6 = arith.constant 0.000000e+00 : f32
    %11 = vector.broadcast %cst_6 : f32 to vector<32x128xf32>
    %12 = arith.maximumf %10, %11 : vector<32x128xf32>
    %13 = vector.shape_cast %12 : vector<32x128xf32> to vector<2x16x128xf32>
    %c0_7 = arith.constant 0 : index
    %c0_8 = arith.constant 0 : index
    %c0_9 = arith.constant 0 : index
    %14 = vector.load %arg4[%c0_7, %c0_8, %c0_9] : memref<2x16x128xf32, #tpu.memory_space<vmem>>, vector<2x16x128xf32>
    tpu.vector_store %arg4[%c0_7, %c0_8, %c0_9], %13 {strides = array<i32>} : memref<2x16x128xf32, #tpu.memory_space<vmem>>, vector<2x16x128xf32>,
    return
  }
  func.func @transform_0(%arg0: i32) -> (i32, i32, i32) {
    %c0_i32 = arith.constant 0 : i32
    %c0_i32_0 = arith.constant 0 : i32
    %c0_i32_1 = arith.constant 0 : i32
    return %arg0, %c0_i32, %c0_i32_0 : i32, i32, i32
  }
  func.func @transform_1(%arg0: i32) -> (i32, i32) {
    %c0_i32 = arith.constant 0 : i32
    %c0_i32_0 = arith.constant 0 : i32
    %c0_i32_1 = arith.constant 0 : i32
    return %c0_i32, %c0_i32_0 : i32, i32
  }
  func.func @transform_2(%arg0: i32) -> (i32, i32) {
    %c0_i32 = arith.constant 0 : i32
    %c0_i32_0 = arith.constant 0 : i32
    %c0_i32_1 = arith.constant 0 : i32
    return %c0_i32, %c0_i32_0 : i32, i32
  }
  func.func @transform_3(%arg0: i32) -> (i32, i32, i32) {
    %c0_i32 = arith.constant 0 : i32
    %c0_i32_0 = arith.constant 0 : i32
    %c0_i32_1 = arith.constant 0 : i32
    return %arg0, %c0_i32, %c0_i32_0 : i32, i32, i32
  }
}

module attributes {stable_mosaic.version = 11 : i64} {
  func.func @_conv_bn_relu_kernel(%arg0: i32, %arg1: memref<2x18x64xbf16, #tpu.memory_space<vmem>>, %arg2: memref<192x128xbf16, #tpu.memory_space<vmem>>, %arg3: memref<1x128xf32, #tpu.memory_space<vmem>>, %arg4: memref<2x16x128xf32, #tpu.memory_space<vmem>>) attributes {dimension_semantics = [#tpu.dimension_semantics<parallel>], iteration_bounds = array<i64: 1>, scalar_prefetch = 0 : i64, scratch_operands = 0 : i64, tpu.core_type = #tpu.core_type<tc>, window_params = [{transform_indices = @transform_0, window_bounds = array<i64: 2, 18, 64>}, {pipeline_mode = #tpu.pipeline_mode<synchronous>, transform_indices = @transform_1, window_bounds = array<i64: 192, 128>}, {pipeline_mode = #tpu.pipeline_mode<synchronous>, transform_indices = @transform_2, window_bounds = array<i64: 1, 128>}, {transform_indices = @transform_3, window_bounds = array<i64: 2, 16, 128>}]} {
    %c0 = arith.constant 0 : index
    %c0_0 = arith.constant 0 : index
    %c0_1 = arith.constant 0 : index
    %0 = vector.load %arg1[%c0, %c0_0, %c0_1] : memref<2x18x64xbf16, #tpu.memory_space<vmem>>, vector<2x18x64xbf16>
    %1 = vector.extract_strided_slice %0 {offsets = [0, 0, 0], sizes = [2, 16, 64], strides = [1, 1, 1]} : vector<2x18x64xbf16> to vector<2x16x64xbf16>
    %2 = vector.extract_strided_slice %0 {offsets = [0, 1, 0], sizes = [2, 16, 64], strides = [1, 1, 1]} : vector<2x18x64xbf16> to vector<2x16x64xbf16>
    %3 = vector.extract_strided_slice %0 {offsets = [0, 2, 0], sizes = [2, 16, 64], strides = [1, 1, 1]} : vector<2x18x64xbf16> to vector<2x16x64xbf16>
    %4 = tpu.concatenate %1, %2, %3 in 2 : vector<2x16x64xbf16>, vector<2x16x64xbf16>, vector<2x16x64xbf16> -> vector<2x16x192xbf16>
    %5 = vector.shape_cast %4 : vector<2x16x192xbf16> to vector<32x192xbf16>
    %c0_2 = arith.constant 0 : index
    %c0_3 = arith.constant 0 : index
    %6 = vector.load %arg2[%c0_2, %c0_3] : memref<192x128xbf16, #tpu.memory_space<vmem>>, vector<192x128xbf16>
    %cst = arith.constant dense<0.000000e+00> : vector<32x128xf32>
    %7 = tpu.matmul %5, %6, %cst {dimension_numbers = #tpu.dot_dimension_numbers<[1], [0], [0], [1], [0, 0, 1, 1], [], []>} : vector<32x192xbf16>, vector<192x128xbf16>, vector<32x128xf32> -> vector<32x128xf32>
    %c0_4 = arith.constant 0 : index
    %c0_5 = arith.constant 0 : index
    %8 = vector.load %arg3[%c0_4, %c0_5] : memref<1x128xf32, #tpu.memory_space<vmem>>, vector<1x128xf32>
    %9 = vector.broadcast %8 : vector<1x128xf32> to vector<32x128xf32>
    %10 = arith.addf %7, %9 : vector<32x128xf32>
    %cst_6 = arith.constant 0.000000e+00 : f32
    %11 = vector.broadcast %cst_6 : f32 to vector<32x128xf32>
    %12 = arith.maximumf %10, %11 : vector<32x128xf32>
    %13 = vector.shape_cast %12 : vector<32x128xf32> to vector<2x16x128xf32>
    %c0_7 = arith.constant 0 : index
    %c0_8 = arith.constant 0 : index
    %c0_9 = arith.constant 0 : index
    %14 = vector.load %arg4[%c0_7, %c0_8, %c0_9] : memref<2x16x128xf32, #tpu.memory_space<vmem>>, vector<2x16x128xf32>
    tpu.vector_store %arg4[%c0_7, %c0_8, %c0_9], %13 {strides = array<i32>} : memref<2x16x128xf32, #tpu.memory_space<vmem>>, vector<2x16x128xf32>,
    return
  }
  func.func @transform_0(%arg0: i32) -> (i32, i32, i32) {
    %c0_i32 = arith.constant 0 : i32
    %c0_i32_0 = arith.constant 0 : i32
    %c0_i32_1 = arith.constant 0 : i32
    return %arg0, %c0_i32, %c0_i32_0 : i32, i32, i32
  }
  func.func @transform_1(%arg0: i32) -> (i32, i32) {
    %c0_i32 = arith.constant 0 : i32
    %c0_i32_0 = arith.constant 0 : i32
    %c0_i32_1 = arith.constant 0 : i32
    return %c0_i32, %c0_i32_0 : i32, i32
  }
  func.func @transform_2(%arg0: i32) -> (i32, i32) {
    %c0_i32 = arith.constant 0 : i32
    %c0_i32_0 = arith.constant 0 : i32
    %c0_i32_1 = arith.constant 0 : i32
    return %c0_i32, %c0_i32_0 : i32, i32
  }
  func.func @transform_3(%arg0: i32) -> (i32, i32, i32) {
    %c0_i32 = arith.constant 0 : i32
    %c0_i32_0 = arith.constant 0 : i32
    %c0_i32_1 = arith.constant 0 : i32
    return %arg0, %c0_i32, %c0_i32_0 : i32, i32, i32
  }
}

</mosaic_0001>

<llo_original>
// kernel: tpu_custom_call.1
$region0: #{tpu_custom_call.1}
  #allocation0 [shape = 'u32[]', space=smem, size = 0x4, offset = 0x4, fixed_abs, tag = 'smem constant byte address 0x4 - core index']
  #allocation1 [shape = 'u32[144,128]{1,0:T(1,128)}', space=vmem, size = 0x12000, scoped, tag = 'internal scratch']
  %s0 = inlined_call_operand.vmem [shape: bf16[2,18,64], index: 0, kind: input, shape index: {}]
  %s1 = inlined_call_operand.hbm [shape: bf16[192,128], index: 1, kind: input, shape index: {}]
  %s2 = inlined_call_operand.vmem [shape: f32[1,128], index: 2, kind: input, shape index: {}]
  %s3 = inlined_call_operand.hbm [shape: f32[2,16,128], index: 3, kind: output, shape index: {}]
  %s4 = sld [smem:[#allocation0]]
  $region26: #{tpu_custom_call.1} parent=0
    _
  %s6 = ssub.s32 1, %s4
  %s7 = scalar_select 0, %s6, %s4
  $region1: #{tpu_custom_call.1} parent=0
    #allocation2 [shape = 'u8[49152]{0}', space=vmem, size = 0xc000, scoped, tag = 'input window, operand 1, single buffered']
    #allocation3 [shape = 's32[1]{0}', space=sflag, size = 0x4, scoped, tag = 'scoped memory for tpu_custom_call.1']
    #allocation4 [shape = 's32[1]{0}', space=sflag, size = 0x4, scoped, tag = 'scoped memory for tpu_custom_call.1']
    #allocation5 [shape = 'u8[16384]{0}', space=vmem, size = 0x4000, scoped, tag = 'output window, operand 0, single buffered']
    %8 = vsyncpa [#allocation3], 0
    %9 = vsyncpa [#allocation4], 0
    // Predicated region
    $region2: #{tpu_custom_call.1} parent=1 // pred_check
      _
    $region3: #{tpu_custom_call.1} parent=1 // pred_check_branch
      %11 = sbr.rel (0) target = $region5
    $region4: #{tpu_custom_call.1} parent=1 // pred_region
      _
    $region5: #{tpu_custom_call.1} parent=1 // pred_fallthru
      _
    // Predicated region
    $region6: #{tpu_custom_call.1} parent=1 // pred_check
      _
    $region7: #{tpu_custom_call.1} parent=1 // pred_check_branch
      %13 = sbr.rel (0) target = $region9
    $region8: #{tpu_custom_call.1} parent=1 // pred_region
      %s15 = ssub.s32 1536, 1536
      %16 = vsyncadd [#allocation3], %s15
      %s17 = sshll.u32 [#allocation2], 4
      %s18 = int_to_ptr.vmem [resolvable:$true] %s17
      %23 = dma.hbm_to_vmem [thread:$0]  %s1, 1536, %s18, [#allocation3], 64, 64, 4
    $region9: #{tpu_custom_call.1} parent=1 // pred_fallthru
      _
    // Predicated region
    $region10: #{tpu_custom_call.1} parent=1 // pred_check
      _
    $region11: #{tpu_custom_call.1} parent=1 // pred_check_branch
      %25 = sbr.rel (0) target = $region13
    $region12: #{tpu_custom_call.1} parent=1 // pred_region
      _
    $region13: #{tpu_custom_call.1} parent=1 // pred_fallthru
      _
    // Predicated region
    $region14: #{tpu_custom_call.1} parent=1 // pred_check
      _
    $region15: #{tpu_custom_call.1} parent=1 // pred_check_branch
      %27 = sbr.rel (0) target = $region17
    $region16: #{tpu_custom_call.1} parent=1 // pred_region
      %28 = dma.done [#allocation3], 1536
    $region17: #{tpu_custom_call.1} parent=1 // pred_fallthru
      _
    %v30 = vld [vmem:[%s0] sm:$0xf]
    %v31 = vld [vmem:[%s0 + $0x4] sm:$0xf]
    %v32 = vld [vmem:[%s0 + $0x8] sm:$0x1]
    %v33 = vld [vmem:[%s0 + $0xc] sm:$0xf]
    %v34 = vld [vmem:[%s0 + $0x10] sm:$0xf]
    %v35 = vld [vmem:[%s0 + $0x14] sm:$0x1]
    %v40 = vunpack.c.l.b16 %v30
    %v41 = vunpack.c.l.b16 %v31
    %v42 = vunpack.c.l.b16 %v33
    %v43 = vunpack.c.l.b16 %v34
    %v44 = vpack.c.b16 %v41, %v40
    %v45 = vpack.c.b16 %v43, %v42
    %v48 = vunpack.c.l.b16 %v32
    %v49 = vunpack.c.l.b16 %v35
    %v50 = vpack.c.b16 %v48, %v48
    %v51 = vpack.c.b16 %v49, %v49
    %vm52 = vsmask.f32 7424
    %v54 = vshrl.u32 %v44, 16
    %v56 = vshll.u32 %v44, 16
    %v58 = vrot.slane %v56, 1
    %v59 = vor.u32 %v54, %v58
    %v61 = vshll.u32 %v50, 16
    %v63 = vrot.slane %v61, 1
    %v64 = vsel %vm52, %v59, %v63
    %v66 = vshrl.u32 %v45, 16
    %v68 = vshll.u32 %v45, 16
    %v70 = vrot.slane %v68, 1
    %v71 = vor.u32 %v66, %v70
    %v73 = vshll.u32 %v51, 16
    %v75 = vrot.slane %v73, 1
    %v76 = vsel %vm52, %v71, %v75
    %77 = vrot.lane.b32.xlu0 %v64, 64
    %v78 = vpop.permute.xlu0 %77
    %79 = vrot.lane.b32.xlu0 %v76, 64
    %v80 = vpop.permute.xlu0 %79
    %vm81 = vcmask 1046528
    %v82 = vrot.slane %v44, 1
    %v83 = vrot.slane %v50, 1
    %v84 = vsel %vm81, %v82, %v83
    %v85 = vrot.slane %v45, 1
    %v86 = vrot.slane %v51, 1
    %v87 = vsel %vm81, %v85, %v86
    %vm88 = vcmask 523264
    %v90 = vsel %vm88, %v44, %v78
    %v93 = vsel %vm88, %v45, %v80
    %v95 = vld [vmem:[#allocation2] sm:$0xf]
    %v96 = vld [vmem:[#allocation2 + $0x4] sm:$0xf]
    %v97 = vld [vmem:[#allocation2 + $0x8] sm:$0xf]
    %v98 = vld [vmem:[#allocation2 + $0xc] sm:$0xf]
    %v99 = vld [vmem:[#allocation2 + $0x10] sm:$0xf]
    %v100 = vld [vmem:[#allocation2 + $0x14] sm:$0xf]
    %v101 = vld [vmem:[#allocation2 + $0x18] sm:$0xf]
    %v102 = vld [vmem:[#allocation2 + $0x1c] sm:$0xf]
    %v103 = vld [vmem:[#allocation2 + $0x20] sm:$0xf]
    %v104 = vld [vmem:[#allocation2 + $0x24] sm:$0xf]
    %v105 = vld [vmem:[#allocation2 + $0x28] sm:$0xf]
    %v106 = vld [vmem:[#allocation2 + $0x2c] sm:$0xf]
    %v107 = vld [vmem:[#allocation2 + $0x30] sm:$0xf]
    %v108 = vld [vmem:[#allocation2 + $0x34] sm:$0xf]
    %v109 = vld [vmem:[#allocation2 + $0x38] sm:$0xf]
    %v110 = vld [vmem:[#allocation2 + $0x3c] sm:$0xf]
    %v111 = vld [vmem:[#allocation2 + $0x40] sm:$0xf]
    %v112 = vld [vmem:[#allocation2 + $0x44] sm:$0xf]
    %v113 = vld [vmem:[#allocation2 + $0x48] sm:$0xf]
    %v114 = vld [vmem:[#allocation2 + $0x4c] sm:$0xf]
    %v115 = vld [vmem:[#allocation2 + $0x50] sm:$0xf]
    %v116 = vld [vmem:[#allocation2 + $0x54] sm:$0xf]
    %v117 = vld [vmem:[#allocation2 + $0x58] sm:$0xf]
    %v118 = vld [vmem:[#allocation2 + $0x5c] sm:$0xf]
    %v119 = vld [vmem:[%s2] sm:$0x1]
    %v121 = vlaneseq
    %v122 = vshrl.u32 %v121, 7
    %v123 = vsub.s32 0, %v122
    %v124 = vrot.slane %v119, %v123
    %v150 = vunpack.c.l.b16 %v95
    %v151 = vunpack.c.l.b16 %v96
    %v152 = vunpack.c.l.b16 %v97
    %v153 = vunpack.c.l.b16 %v98
    %v154 = vunpack.c.l.b16 %v99
    %v155 = vunpack.c.l.b16 %v100
    %v156 = vunpack.c.l.b16 %v101
    %v157 = vunpack.c.l.b16 %v102
    %v158 = vunpack.c.l.b16 %v103
    %v159 = vunpack.c.l.b16 %v104
    %v160 = vunpack.c.l.b16 %v105
    %v161 = vunpack.c.l.b16 %v106
    %v162 = vunpack.c.l.b16 %v107
    %v163 = vunpack.c.l.b16 %v108
    %v164 = vunpack.c.l.b16 %v109
    %v165 = vunpack.c.l.b16 %v110
    %v166 = vunpack.c.l.b16 %v111
    %v167 = vunpack.c.l.b16 %v112
    %v168 = vunpack.c.l.b16 %v113
    %v169 = vunpack.c.l.b16 %v114
    %v170 = vunpack.c.l.b16 %v115
    %v171 = vunpack.c.l.b16 %v116
    %v172 = vunpack.c.l.b16 %v117
    %v173 = vunpack.c.l.b16 %v118
    %v174 = vpack.c.b16 %v151, %v150
    %v175 = vpack.c.b16 %v153, %v152
    %v176 = vpack.c.b16 %v155, %v154
    %v177 = vpack.c.b16 %v157, %v156
    %v178 = vpack.c.b16 %v159, %v158
    %v179 = vpack.c.b16 %v161, %v160
    %v180 = vpack.c.b16 %v163, %v162
    %v181 = vpack.c.b16 %v165, %v164
    %v182 = vpack.c.b16 %v167, %v166
    %v183 = vpack.c.b16 %v169, %v168
    %v184 = vpack.c.b16 %v171, %v170
    %v185 = vpack.c.b16 %v173, %v172
    %v199 = vsel %vm88, %v84, 0
    %v202 = vsel %vm88, %v87, 0
    %204 = vmatprep.subr.bf16.mxu0 0
    %205 = vmatpush1.bf16.msra.mxu0 %v174
    %206 = vmatprep.subr.bf16.mxu0 0
    %207 = vmatpush1.bf16.msra.mxu0 %v175
    %208 = vmatprep.subr.bf16.mxu0 0
    %209 = vmatpush1.bf16.msra.mxu0 %v176
    %210 = vmatprep.subr.bf16.mxu0 0
    %211 = vmatpush1.bf16.msra.mxu0 %v177
    %212 = vmatprep.subr.bf16.mxu0 0
    %213 = vmatpush1.bf16.msra.mxu0 %v178
    %214 = vmatprep.subr.bf16.mxu0 0
    %215 = vmatpush1.bf16.msra.mxu0 %v179
    %216 = vmatprep.subr.bf16.mxu0 0
    %217 = vmatpush1.bf16.msra.mxu0 %v180
    %218 = vmatprep.subr.bf16.mxu0 0
    %219 = vmatpush1.bf16.msra.mxu0 %v181
    %220 = vmatprep.subr.bf16.mxu0 0
    %221 = vmatpush1.bf16.msra.mxu0 %v182
    %222 = vmatprep.subr.bf16.mxu0 0
    %223 = vmatpush1.bf16.msra.mxu0 %v183
    %224 = vmatprep.subr.bf16.mxu0 0
    %225 = vmatpush1.bf16.msra.mxu0 %v184
    %226 = vmatprep.subr.bf16.mxu0 0
    %227 = vmatpush1.bf16.msra.mxu0 %v185
    %228 = vmatprep.subr.bf16.mxu0 0
    %229 = vmatpush1.bf16.msra.mxu0 0
    %230 = vmatprep.subr.bf16.mxu0 0
    %231 = vmatpush1.bf16.msra.mxu0 0
    %232 = vmatprep.subr.bf16.mxu0 0
    %233 = vmatpush1.bf16.msra.mxu0 0
    %234 = vmatprep.subr.bf16.mxu0 0
    %235 = vmatpush1.bf16.msra.mxu0 0
    %236 = vmatprep.mubr.bf16.mxu0 %v199
    %237 = vmatmul.mubr.bf16.gmra.mrb[0].mxu0 %v90
    %v238 = vpop.f32.mrb[0].mxu0
    %v239 = vadd.f32 %v124, %v238
    %v240 = vpop.f32.mrb[0].mxu0
    %v241 = vpop.f32.mrb[0].mxu0
    %v242 = vadd.f32 %v124, %v241
    %v243 = vpop.f32.mrb[0].mxu0
    %244 = vmatprep.mubr.bf16.mxu0 %v202
    %245 = vmatmul.mubr.bf16.gmra.mrb[0].mxu0 %v93
    %v246 = vpop.f32.mrb[0].mxu0
    %v247 = vadd.f32 %v124, %v246
    %v248 = vpop.f32.mrb[0].mxu0
    %v249 = vpop.f32.mrb[0].mxu0
    %v250 = vadd.f32 %v124, %v249
    %v251 = vpop.f32.mrb[0].mxu0
    %252 = vdwg.mxu0
    %v253 = vmax.f32 %v239, 0.0
    %v254 = vmax.f32 %v242, 0.0
    %v255 = vmax.f32 %v247, 0.0
    %v256 = vmax.f32 %v250, 0.0
    %257 = vst [vmem:[#allocation5] sm:$0xff] %v253
    %258 = vst [vmem:[#allocation5 + $0x8] sm:$0xff] %v254
    %259 = vst [vmem:[#allocation5 + $0x10] sm:$0xff] %v255
    %260 = vst [vmem:[#allocation5 + $0x18] sm:$0xff] %v256
    // Predicated region
    $region18: #{tpu_custom_call.1} parent=1 // pred_check
      _
    $region19: #{tpu_custom_call.1} parent=1 // pred_check_branch
      %262 = sbr.rel (0) target = $region21
    $region20: #{tpu_custom_call.1} parent=1 // pred_region
      %s264 = ssub.s32 512, 512
      %265 = vsyncadd [#allocation4], %s264
      %s266 = sshll.u32 [#allocation5], 4
      %s267 = int_to_ptr.vmem [resolvable:$true] %s266
      %272 = dma.vmem_to_hbm [thread:$0]  %s267, 512, %s3, [#allocation4], 128, 128, 8
    $region21: #{tpu_custom_call.1} parent=1 // pred_fallthru
      _
    // Predicated region
    $region22: #{tpu_custom_call.1} parent=1 // pred_check
      _
    $region23: #{tpu_custom_call.1} parent=1 // pred_check_branch
      %274 = sbr.rel (0) target = $region25
    $region24: #{tpu_custom_call.1} parent=1 // pred_region
      %275 = dma.done [#allocation4], 512
    $region25: #{tpu_custom_call.1} parent=1 // pred_fallthru
      _
    %276 = vsyncpa [#allocation3], 1
    %277 = vsyncpa [#allocation4], 1

// kernel: tpu_custom_call.1
$region0: #{tpu_custom_call.1}
  #allocation0 [shape = 'u32[]', space=smem, size = 0x4, offset = 0x4, fixed_abs, tag = 'smem constant byte address 0x4 - core index']
  #allocation1 [shape = 'u32[144,128]{1,0:T(1,128)}', space=vmem, size = 0x12000, scoped, tag = 'internal scratch']
  %s0 = inlined_call_operand.vmem [shape: bf16[2,18,64], index: 0, kind: input, shape index: {}]
  %s1 = inlined_call_operand.hbm [shape: bf16[192,128], index: 1, kind: input, shape index: {}]
  %s2 = inlined_call_operand.vmem [shape: f32[1,128], index: 2, kind: input, shape index: {}]
  %s3 = inlined_call_operand.hbm [shape: f32[2,16,128], index: 3, kind: output, shape index: {}]
  %s4 = sld [smem:[#allocation0]]
  $region26: #{tpu_custom_call.1} parent=0
    _
  %s6 = ssub.s32 1, %s4
  %s7 = scalar_select 0, %s6, %s4
  $region1: #{tpu_custom_call.1} parent=0
    #allocation2 [shape = 'u8[49152]{0}', space=vmem, size = 0xc000, scoped, tag = 'input window, operand 1, single buffered']
    #allocation3 [shape = 's32[1]{0}', space=sflag, size = 0x4, scoped, tag = 'scoped memory for tpu_custom_call.1']
    #allocation4 [shape = 's32[1]{0}', space=sflag, size = 0x4, scoped, tag = 'scoped memory for tpu_custom_call.1']
    #allocation5 [shape = 'u8[16384]{0}', space=vmem, size = 0x4000, scoped, tag = 'output window, operand 0, single buffered']
    %8 = vsyncpa [#allocation3], 0
    %9 = vsyncpa [#allocation4], 0
    // Predicated region
    $region2: #{tpu_custom_call.1} parent=1 // pred_check
      _
    $region3: #{tpu_custom_call.1} parent=1 // pred_check_branch
      %11 = sbr.rel (0) target = $region5
    $region4: #{tpu_custom_call.1} parent=1 // pred_region
      _
    $region5: #{tpu_custom_call.1} parent=1 // pred_fallthru
      _
    // Predicated region
    $region6: #{tpu_custom_call.1} parent=1 // pred_check
      _
    $region7: #{tpu_custom_call.1} parent=1 // pred_check_branch
      %13 = sbr.rel (0) target = $region9
    $region8: #{tpu_custom_call.1} parent=1 // pred_region
      %s15 = ssub.s32 1536, 1536
      %16 = vsyncadd [#allocation3], %s15
      %s17 = sshll.u32 [#allocation2], 4
      %s18 = int_to_ptr.vmem [resolvable:$true] %s17
      %23 = dma.hbm_to_vmem [thread:$0]  %s1, 1536, %s18, [#allocation3], 64, 64, 4
    $region9: #{tpu_custom_call.1} parent=1 // pred_fallthru
      _
    // Predicated region
    $region10: #{tpu_custom_call.1} parent=1 // pred_check
      _
    $region11: #{tpu_custom_call.1} parent=1 // pred_check_branch
      %25 = sbr.rel (0) target = $region13
    $region12: #{tpu_custom_call.1} parent=1 // pred_region
      _
    $region13: #{tpu_custom_call.1} parent=1 // pred_fallthru
      _
    // Predicated region
    $region14: #{tpu_custom_call.1} parent=1 // pred_check
      _
    $region15: #{tpu_custom_call.1} parent=1 // pred_check_branch
      %27 = sbr.rel (0) target = $region17
    $region16: #{tpu_custom_call.1} parent=1 // pred_region
      %28 = dma.done [#allocation3], 1536
    $region17: #{tpu_custom_call.1} parent=1 // pred_fallthru
      _
    %v30 = vld [vmem:[%s0] sm:$0xf]
    %v31 = vld [vmem:[%s0 + $0x4] sm:$0xf]
    %v32 = vld [vmem:[%s0 + $0x8] sm:$0x1]
    %v33 = vld [vmem:[%s0 + $0xc] sm:$0xf]
    %v34 = vld [vmem:[%s0 + $0x10] sm:$0xf]
    %v35 = vld [vmem:[%s0 + $0x14] sm:$0x1]
    %v40 = vunpack.c.l.b16 %v30
    %v41 = vunpack.c.l.b16 %v31
    %v42 = vunpack.c.l.b16 %v33
    %v43 = vunpack.c.l.b16 %v34
    %v44 = vpack.c.b16 %v41, %v40
    %v45 = vpack.c.b16 %v43, %v42
    %v48 = vunpack.c.l.b16 %v32
    %v49 = vunpack.c.l.b16 %v35
    %v50 = vpack.c.b16 %v48, %v48
    %v51 = vpack.c.b16 %v49, %v49
    %vm52 = vsmask.f32 7424
    %v54 = vshrl.u32 %v44, 16
    %v56 = vshll.u32 %v44, 16
    %v58 = vrot.slane %v56, 1
    %v59 = vor.u32 %v54, %v58
    %v61 = vshll.u32 %v50, 16
    %v63 = vrot.slane %v61, 1
    %v64 = vsel %vm52, %v59, %v63
    %v66 = vshrl.u32 %v45, 16
    %v68 = vshll.u32 %v45, 16
    %v70 = vrot.slane %v68, 1
    %v71 = vor.u32 %v66, %v70
    %v73 = vshll.u32 %v51, 16
    %v75 = vrot.slane %v73, 1
    %v76 = vsel %vm52, %v71, %v75
    %77 = vrot.lane.b32.xlu0 %v64, 64
    %v78 = vpop.permute.xlu0 %77
    %79 = vrot.lane.b32.xlu0 %v76, 64
    %v80 = vpop.permute.xlu0 %79
    %vm81 = vcmask 1046528
    %v82 = vrot.slane %v44, 1
    %v83 = vrot.slane %v50, 1
    %v84 = vsel %vm81, %v82, %v83
    %v85 = vrot.slane %v45, 1
    %v86 = vrot.slane %v51, 1
    %v87 = vsel %vm81, %v85, %v86
    %vm88 = vcmask 523264
    %v90 = vsel %vm88, %v44, %v78
    %v93 = vsel %vm88, %v45, %v80
    %v95 = vld [vmem:[#allocation2] sm:$0xf]
    %v96 = vld [vmem:[#allocation2 + $0x4] sm:$0xf]
    %v97 = vld [vmem:[#allocation2 + $0x8] sm:$0xf]
    %v98 = vld [vmem:[#allocation2 + $0xc] sm:$0xf]
    %v99 = vld [vmem:[#allocation2 + $0x10] sm:$0xf]
    %v100 = vld [vmem:[#allocation2 + $0x14] sm:$0xf]
    %v101 = vld [vmem:[#allocation2 + $0x18] sm:$0xf]
    %v102 = vld [vmem:[#allocation2 + $0x1c] sm:$0xf]
    %v103 = vld [vmem:[#allocation2 + $0x20] sm:$0xf]
    %v104 = vld [vmem:[#allocation2 + $0x24] sm:$0xf]
    %v105 = vld [vmem:[#allocation2 + $0x28] sm:$0xf]
    %v106 = vld [vmem:[#allocation2 + $0x2c] sm:$0xf]
    %v107 = vld [vmem:[#allocation2 + $0x30] sm:$0xf]
    %v108 = vld [vmem:[#allocation2 + $0x34] sm:$0xf]
    %v109 = vld [vmem:[#allocation2 + $0x38] sm:$0xf]
    %v110 = vld [vmem:[#allocation2 + $0x3c] sm:$0xf]
    %v111 = vld [vmem:[#allocation2 + $0x40] sm:$0xf]
    %v112 = vld [vmem:[#allocation2 + $0x44] sm:$0xf]
    %v113 = vld [vmem:[#allocation2 + $0x48] sm:$0xf]
    %v114 = vld [vmem:[#allocation2 + $0x4c] sm:$0xf]
    %v115 = vld [vmem:[#allocation2 + $0x50] sm:$0xf]
    %v116 = vld [vmem:[#allocation2 + $0x54] sm:$0xf]
    %v117 = vld [vmem:[#allocation2 + $0x58] sm:$0xf]
    %v118 = vld [vmem:[#allocation2 + $0x5c] sm:$0xf]
    %v119 = vld [vmem:[%s2] sm:$0x1]
    %v121 = vlaneseq
    %v122 = vshrl.u32 %v121, 7
    %v123 = vsub.s32 0, %v122
    %v124 = vrot.slane %v119, %v123
    %v150 = vunpack.c.l.b16 %v95
    %v151 = vunpack.c.l.b16 %v96
    %v152 = vunpack.c.l.b16 %v97
    %v153 = vunpack.c.l.b16 %v98
    %v154 = vunpack.c.l.b16 %v99
    %v155 = vunpack.c.l.b16 %v100
    %v156 = vunpack.c.l.b16 %v101
    %v157 = vunpack.c.l.b16 %v102
    %v158 = vunpack.c.l.b16 %v103
    %v159 = vunpack.c.l.b16 %v104
    %v160 = vunpack.c.l.b16 %v105
    %v161 = vunpack.c.l.b16 %v106
    %v162 = vunpack.c.l.b16 %v107
    %v163 = vunpack.c.l.b16 %v108
    %v164 = vunpack.c.l.b16 %v109
    %v165 = vunpack.c.l.b16 %v110
    %v166 = vunpack.c.l.b16 %v111
    %v167 = vunpack.c.l.b16 %v112
    %v168 = vunpack.c.l.b16 %v113
    %v169 = vunpack.c.l.b16 %v114
    %v170 = vunpack.c.l.b16 %v115
    %v171 = vunpack.c.l.b16 %v116
    %v172 = vunpack.c.l.b16 %v117
    %v173 = vunpack.c.l.b16 %v118
    %v174 = vpack.c.b16 %v151, %v150
    %v175 = vpack.c.b16 %v153, %v152
    %v176 = vpack.c.b16 %v155, %v154
    %v177 = vpack.c.b16 %v157, %v156
    %v178 = vpack.c.b16 %v159, %v158
    %v179 = vpack.c.b16 %v161, %v160
    %v180 = vpack.c.b16 %v163, %v162
    %v181 = vpack.c.b16 %v165, %v164
    %v182 = vpack.c.b16 %v167, %v166
    %v183 = vpack.c.b16 %v169, %v168
    %v184 = vpack.c.b16 %v171, %v170
    %v185 = vpack.c.b16 %v173, %v172
    %v199 = vsel %vm88, %v84, 0
    %v202 = vsel %vm88, %v87, 0
    %204 = vmatprep.subr.bf16.mxu0 0
    %205 = vmatpush1.bf16.msra.mxu0 %v174
    %206 = vmatprep.subr.bf16.mxu0 0
    %207 = vmatpush1.bf16.msra.mxu0 %v175
    %208 = vmatprep.subr.bf16.mxu0 0
    %209 = vmatpush1.bf16.msra.mxu0 %v176
    %210 = vmatprep.subr.bf16.mxu0 0
    %211 = vmatpush1.bf16.msra.mxu0 %v177
    %212 = vmatprep.subr.bf16.mxu0 0
    %213 = vmatpush1.bf16.msra.mxu0 %v178
    %214 = vmatprep.subr.bf16.mxu0 0
    %215 = vmatpush1.bf16.msra.mxu0 %v179
    %216 = vmatprep.subr.bf16.mxu0 0
    %217 = vmatpush1.bf16.msra.mxu0 %v180
    %218 = vmatprep.subr.bf16.mxu0 0
    %219 = vmatpush1.bf16.msra.mxu0 %v181
    %220 = vmatprep.subr.bf16.mxu0 0
    %221 = vmatpush1.bf16.msra.mxu0 %v182
    %222 = vmatprep.subr.bf16.mxu0 0
    %223 = vmatpush1.bf16.msra.mxu0 %v183
    %224 = vmatprep.subr.bf16.mxu0 0
    %225 = vmatpush1.bf16.msra.mxu0 %v184
    %226 = vmatprep.subr.bf16.mxu0 0
    %227 = vmatpush1.bf16.msra.mxu0 %v185
    %228 = vmatprep.subr.bf16.mxu0 0
    %229 = vmatpush1.bf16.msra.mxu0 0
    %230 = vmatprep.subr.bf16.mxu0 0
    %231 = vmatpush1.bf16.msra.mxu0 0
    %232 = vmatprep.subr.bf16.mxu0 0
    %233 = vmatpush1.bf16.msra.mxu0 0
    %234 = vmatprep.subr.bf16.mxu0 0
    %235 = vmatpush1.bf16.msra.mxu0 0
    %236 = vmatprep.mubr.bf16.mxu0 %v199
    %237 = vmatmul.mubr.bf16.gmra.mrb[0].mxu0 %v90
    %v238 = vpop.f32.mrb[0].mxu0
    %v239 = vadd.f32 %v124, %v238
    %v240 = vpop.f32.mrb[0].mxu0
    %v241 = vpop.f32.mrb[0].mxu0
    %v242 = vadd.f32 %v124, %v241
    %v243 = vpop.f32.mrb[0].mxu0
    %244 = vmatprep.mubr.bf16.mxu0 %v202
    %245 = vmatmul.mubr.bf16.gmra.mrb[0].mxu0 %v93
    %v246 = vpop.f32.mrb[0].mxu0
    %v247 = vadd.f32 %v124, %v246
    %v248 = vpop.f32.mrb[0].mxu0
    %v249 = vpop.f32.mrb[0].mxu0
    %v250 = vadd.f32 %v124, %v249
    %v251 = vpop.f32.mrb[0].mxu0
    %252 = vdwg.mxu0
    %v253 = vmax.f32 %v239, 0.0
    %v254 = vmax.f32 %v242, 0.0
    %v255 = vmax.f32 %v247, 0.0
    %v256 = vmax.f32 %v250, 0.0
    %257 = vst [vmem:[#allocation5] sm:$0xff] %v253
    %258 = vst [vmem:[#allocation5 + $0x8] sm:$0xff] %v254
    %259 = vst [vmem:[#allocation5 + $0x10] sm:$0xff] %v255
    %260 = vst [vmem:[#allocation5 + $0x18] sm:$0xff] %v256
    // Predicated region
    $region18: #{tpu_custom_call.1} parent=1 // pred_check
      _
    $region19: #{tpu_custom_call.1} parent=1 // pred_check_branch
      %262 = sbr.rel (0) target = $region21
    $region20: #{tpu_custom_call.1} parent=1 // pred_region
      %s264 = ssub.s32 512, 512
      %265 = vsyncadd [#allocation4], %s264
      %s266 = sshll.u32 [#allocation5], 4
      %s267 = int_to_ptr.vmem [resolvable:$true] %s266
      %272 = dma.vmem_to_hbm [thread:$0]  %s267, 512, %s3, [#allocation4], 128, 128, 8
    $region21: #{tpu_custom_call.1} parent=1 // pred_fallthru
      _
    // Predicated region
    $region22: #{tpu_custom_call.1} parent=1 // pred_check
      _
    $region23: #{tpu_custom_call.1} parent=1 // pred_check_branch
      %274 = sbr.rel (0) target = $region25
    $region24: #{tpu_custom_call.1} parent=1 // pred_region
      %275 = dma.done [#allocation4], 512
    $region25: #{tpu_custom_call.1} parent=1 // pred_fallthru
      _
    %276 = vsyncpa [#allocation3], 1
    %277 = vsyncpa [#allocation4], 1

</llo_original>
